<compile_context>
chip_gen: v6e
topology: v6e:2x2x1
jax: 0.10.0
libtpu: 0.0.40
codegen_flags: <defaults>
</compile_context>

<pallas_src>
import functools

import jax
import jax.numpy as jnp
from jax.experimental import pallas as pl
from jax.experimental.pallas import tpu as pltpu


def _value_mlp_kernel(x_ref, w1_ref, b1_ref, w2_ref, b2_ref, w3_ref, b3_ref,
                      o_ref, *, mxu_dtype):
    # In-kernel cast: keeps the HBM stream in the caller's dtype (no extra XLA
    # pass over `state`) while the MXU runs its native bf16 when requested.
    x = x_ref[...].astype(mxu_dtype)

    # Layer 1: Linear(state_dim -> hidden) + ReLU  (MXU, f32 accumulation).
    h = jnp.dot(x, w1_ref[...], preferred_element_type=jnp.float32) + b1_ref[...]
    h = jnp.maximum(h, 0.0)

    # Layer 2: Linear(hidden -> hidden) + ReLU  (MXU, f32 accumulation).
    h = jnp.dot(h.astype(w2_ref.dtype), w2_ref[...],
                preferred_element_type=jnp.float32) + b2_ref[...]
    h = jnp.maximum(h, 0.0)

    # Layer 3: Linear(hidden -> 1).  A single-output-column MXU matmul wastes a
    # full MXU pass, so do it as a VPU multiply + cross-lane (XLU) reduction
    # against the (1, hidden) weight row.  (Squeeze happens in the wrapper.)
    o = jnp.sum(h * w3_ref[...], axis=-1, keepdims=True) + b3_ref[...]
    # Output bytes are negligible vs. the state stream; if profiling ever shows
    # the (tb, 1) masked stores dominating, emit a lane-dense (1, tb) row
    # per step instead.
    o_ref[...] = o.astype(o_ref.dtype)


def _round_up(x, m):
    return (x + m - 1) // m * m


def value_function_forward(state, params, *, block_b=32768, use_bf16_mxu=True,
                           vmem_budget_bytes=24 * 1024 * 1024):
    """Fused MLP value function: (B, state_dim) -> (B,)."""
    w1, b1, w2, b2, w3, b3 = params
    B, state_dim = state.shape
    hidden = w1.shape[1]

    # MXU dtype: bf16 is the native matmul dtype on v5e/v6e/v7x.  Weights are
    # tiny (KiB), so casting them once in the wrapper is free; `state` is cast
    # inside the kernel so the HBM stream is read exactly once.
    mxu_dtype = jnp.bfloat16 if use_bf16_mxu else jnp.float32
    w1c = w1.astype(mxu_dtype)
    w2c = w2.astype(mxu_dtype)
    # Last layer as a (1, hidden) row / (1, 1) bias; biases stay f32 (added
    # after the f32 accumulation).
    w3_row = w3.reshape(1, hidden).astype(jnp.float32)
    b3_row = b3.reshape(1, 1).astype(jnp.float32)

    # Sublane multiple of the state block in its *stored* dtype:
    # 8 rows for 4-byte, 16 for 2-byte, 32 for 1-byte elements.
    in_item = jnp.dtype(state.dtype).itemsize
    mult = max(8, 32 // in_item)

    # VMEM budget per grid step: double-buffered state tile + ~4 live f32
    # (tb, hidden) intermediates + double-buffered (tb, 1) output.  Sized so
    # the tile is large enough to amortize the ~0.35 us per-step overhead but
    # stays well inside the scoped-VMEM limit we request below.
    per_row = 2 * state_dim * in_item + 4 * hidden * 4 + 2 * 4
    tb = min(block_b, max(mult, vmem_budget_bytes // per_row),
             _round_up(B, mult))
    tb = max(mult, (tb // mult) * mult)

    grid = (pl.cdiv(B, tb),)  # partial last block; OOB output rows are masked

    # Weights/biases: constant block index -> VMEM-resident across grid steps.
    resident = lambda a: pl.BlockSpec(a.shape, lambda i: (0, 0))

    kernel = functools.partial(_value_mlp_kernel, mxu_dtype=mxu_dtype)

    out = pl.pallas_call(
        kernel,
        out_shape=jax.ShapeDtypeStruct((B, 1), jnp.float32),
        grid=grid,
        in_specs=[
            pl.BlockSpec((tb, state_dim), lambda i: (i, 0)),   # state tile
            resident(w1c), resident(b1),
            resident(w2c), resident(b2),
            resident(w3_row), resident(b3_row),
        ],
        out_specs=pl.BlockSpec((tb, 1), lambda i: (i, 0)),
        compiler_params=pltpu.CompilerParams(
            dimension_semantics=("parallel",),
            # Explicit scoped-VMEM limit so large tiles don't OOM on v5e's
            # 16 MiB default; 32 MiB is within every generation's physical VMEM.
            vmem_limit_bytes=32 * 1024 * 1024,
        ),
    )(state, w1c, b1, w2c, b2, w3_row, b3_row)

    # squeeze_output=True in the PyTorch mlp helper.
    return out[:, 0]


def init_params(key, state_dim, hidden_dim):
    """Deterministic synthetic parameters (Linear-style uniform init)."""
    ks = jax.random.split(key, 6)

    def lin(kw, kb, fan_in, fan_out):
        bound = 1.0 / jnp.sqrt(jnp.float32(fan_in))
        w = jax.random.uniform(kw, (fan_in, fan_out), jnp.float32,
                               -bound, bound)
        b = jax.random.uniform(kb, (1, fan_out), jnp.float32, -bound, bound)
        return w, b

    w1, b1 = lin(ks[0], ks[1], state_dim, hidden_dim)
    w2, b2 = lin(ks[2], ks[3], hidden_dim, hidden_dim)
    w3, b3 = lin(ks[4], ks[5], hidden_dim, 1)
    return (w1, b1, w2, b2, w3, b3)


def reference_forward(state, params):
    w1, b1, w2, b2, w3, b3 = params
    h = jnp.maximum(state @ w1 + b1, 0.0)
    h = jnp.maximum(h @ w2 + b2, 0.0)
    return (h @ w3 + b3)[:, 0]


if __name__ == "__main__":
    # Small shapes consistent with the module: state_dim=16, hidden_dim=32,
    # n_hidden=2.
    batch, state_dim, hidden_dim = 8, 16, 32

    key = jax.random.PRNGKey(0)
    k_params, k_state, k_state2, k_state3 = jax.random.split(key, 4)
    params = init_params(k_params, state_dim, hidden_dim)

    state = jax.random.normal(k_state, (batch, state_dim), jnp.float32)
    ref = reference_forward(state, params)

    # 1) Default path: bf16 MXU matmuls (in-kernel cast), f32 accumulation.
    out = jax.block_until_ready(value_function_forward(state, params))
    assert out.shape == (batch,), out.shape
    assert jnp.allclose(out, ref, atol=5e-2, rtol=5e-2), (out, ref)

    # 2) Exact f32 MXU path.
    out_f32 = jax.block_until_ready(
        value_function_forward(state, params, use_bf16_mxu=False))
    assert out_f32.shape == (batch,), out_f32.shape
    assert jnp.allclose(out_f32, ref, atol=1e-5, rtol=1e-5), (out_f32, ref)

    # 3) Ragged batch: multi-step grid + partial last block (20 = 8+8+4),
    #    masked output stores, no wrapper-side padding.
    state2 = jax.random.normal(k_state2, (20, state_dim), jnp.float32)
    out2 = jax.block_until_ready(
        value_function_forward(state2, params, block_b=8, use_bf16_mxu=False))
    ref2 = reference_forward(state2, params)
    assert out2.shape == (20,), out2.shape
    assert jnp.allclose(out2, ref2, atol=1e-5, rtol=1e-5), (out2, ref2)

    # 4) bf16 state stored in HBM (the case where the 2x bandwidth win is
    #    real): 16-row sublane multiple, ragged tail (40 = 16+16+8).
    state3 = jax.random.normal(
        k_state3, (40, state_dim), jnp.float32).astype(jnp.bfloat16)
    out3 = jax.block_until_ready(
        value_function_forward(state3, params, block_b=16))
    ref3 = reference_forward(state3.astype(jnp.float32), params)
    assert out3.shape == (40,), out3.shape
    assert jnp.allclose(out3, ref3, atol=5e-2, rtol=5e-2), (out3, ref3)

    print("KERNEL_OK")
</pallas_src>

<mosaic_0001>
module attributes {stable_mosaic.version = 11 : i64} {
  func.func @_value_mlp_kernel(%arg0: i32, %arg1: memref<8x16xf32, #tpu.memory_space<vmem>>, %arg2: memref<16x32xbf16, #tpu.memory_space<vmem>>, %arg3: memref<1x32xf32, #tpu.memory_space<vmem>>, %arg4: memref<32x32xbf16, #tpu.memory_space<vmem>>, %arg5: memref<1x32xf32, #tpu.memory_space<vmem>>, %arg6: memref<1x32xf32, #tpu.memory_space<vmem>>, %arg7: memref<1x1xf32, #tpu.memory_space<vmem>>, %arg8: memref<8x1xf32, #tpu.memory_space<vmem>>) attributes {dimension_semantics = [#tpu.dimension_semantics<parallel>], iteration_bounds = array<i64: 1>, scalar_prefetch = 0 : i64, scratch_operands = 0 : i64, tpu.core_type = #tpu.core_type<tc>, window_params = [{transform_indices = @transform_0, window_bounds = array<i64: 8, 16>}, {pipeline_mode = #tpu.pipeline_mode<synchronous>, transform_indices = @transform_1, window_bounds = array<i64: 16, 32>}, {pipeline_mode = #tpu.pipeline_mode<synchronous>, transform_indices = @transform_2, window_bounds = array<i64: 1, 32>}, {pipeline_mode = #tpu.pipeline_mode<synchronous>, transform_indices = @transform_3, window_bounds = array<i64: 32, 32>}, {pipeline_mode = #tpu.pipeline_mode<synchronous>, transform_indices = @transform_4, window_bounds = array<i64: 1, 32>}, {pipeline_mode = #tpu.pipeline_mode<synchronous>, transform_indices = @transform_5, window_bounds = array<i64: 1, 32>}, {pipeline_mode = #tpu.pipeline_mode<synchronous>, transform_indices = @transform_6, window_bounds = array<i64: 1, 1>}, {transform_indices = @transform_7, window_bounds = array<i64: 8, 1>}]} {
    %c0 = arith.constant 0 : index
    %c0_0 = arith.constant 0 : index
    %0 = vector.load %arg1[%c0, %c0_0] : memref<8x16xf32, #tpu.memory_space<vmem>>, vector<8x16xf32>
    %1 = arith.truncf %0 : vector<8x16xf32> to vector<8x16xbf16>
    %c0_1 = arith.constant 0 : index
    %c0_2 = arith.constant 0 : index
    %2 = vector.load %arg2[%c0_1, %c0_2] : memref<16x32xbf16, #tpu.memory_space<vmem>>, vector<16x32xbf16>
    %cst = arith.constant dense<0.000000e+00> : vector<8x32xf32>
    %3 = tpu.matmul %1, %2, %cst {dimension_numbers = #tpu.dot_dimension_numbers<[1], [0], [0], [1], [0, 0, 1, 1], [], []>} : vector<8x16xbf16>, vector<16x32xbf16>, vector<8x32xf32> -> vector<8x32xf32>
    %c0_3 = arith.constant 0 : index
    %c0_4 = arith.constant 0 : index
    %4 = vector.load %arg3[%c0_3, %c0_4] : memref<1x32xf32, #tpu.memory_space<vmem>>, vector<1x32xf32>
    %5 = vector.broadcast %4 : vector<1x32xf32> to vector<8x32xf32>
    %6 = arith.addf %3, %5 : vector<8x32xf32>
    %cst_5 = arith.constant 0.000000e+00 : f32
    %7 = vector.broadcast %cst_5 : f32 to vector<8x32xf32>
    %8 = arith.maximumf %6, %7 : vector<8x32xf32>
    %9 = arith.truncf %8 : vector<8x32xf32> to vector<8x32xbf16>
    %c0_6 = arith.constant 0 : index
    %c0_7 = arith.constant 0 : index
    %10 = vector.load %arg4[%c0_6, %c0_7] : memref<32x32xbf16, #tpu.memory_space<vmem>>, vector<32x32xbf16>
    %cst_8 = arith.constant dense<0.000000e+00> : vector<8x32xf32>
    %11 = tpu.matmul %9, %10, %cst_8 {dimension_numbers = #tpu.dot_dimension_numbers<[1], [0], [0], [1], [0, 0, 1, 1], [], []>} : vector<8x32xbf16>, vector<32x32xbf16>, vector<8x32xf32> -> vector<8x32xf32>
    %c0_9 = arith.constant 0 : index
    %c0_10 = arith.constant 0 : index
    %12 = vector.load %arg5[%c0_9, %c0_10] : memref<1x32xf32, #tpu.memory_space<vmem>>, vector<1x32xf32>
    %13 = vector.broadcast %12 : vector<1x32xf32> to vector<8x32xf32>
    %14 = arith.addf %11, %13 : vector<8x32xf32>
    %cst_11 = arith.constant 0.000000e+00 : f32
    %15 = vector.broadcast %cst_11 : f32 to vector<8x32xf32>
    %16 = arith.maximumf %14, %15 : vector<8x32xf32>
    %c0_12 = arith.constant 0 : index
    %c0_13 = arith.constant 0 : index
    %17 = vector.load %arg6[%c0_12, %c0_13] : memref<1x32xf32, #tpu.memory_space<vmem>>, vector<1x32xf32>
    %18 = vector.broadcast %17 : vector<1x32xf32> to vector<8x32xf32>
    %19 = arith.mulf %16, %18 : vector<8x32xf32>
    %cst_14 = arith.constant dense<0.000000e+00> : vector<8xf32>
    %20 = vector.multi_reduction <add>, %19, %cst_14 [1] : vector<8x32xf32> to vector<8xf32>
    %21 = vector.shape_cast %20 : vector<8xf32> to vector<8x1xf32>
    %c0_15 = arith.constant 0 : index
    %c0_16 = arith.constant 0 : index
    %22 = vector.load %arg7[%c0_15, %c0_16] : memref<1x1xf32, #tpu.memory_space<vmem>>, vector<1x1xf32>
    %23 = vector.broadcast %22 : vector<1x1xf32> to vector<8x1xf32>
    %24 = arith.addf %21, %23 : vector<8x1xf32>
    %c0_17 = arith.constant 0 : index
    %c0_18 = arith.constant 0 : index
    %25 = vector.load %arg8[%c0_17, %c0_18] : memref<8x1xf32, #tpu.memory_space<vmem>>, vector<8x1xf32>
    tpu.vector_store %arg8[%c0_17, %c0_18], %24 {strides = array<i32>} : memref<8x1xf32, #tpu.memory_space<vmem>>, vector<8x1xf32>,
    return
  }
  func.func @transform_0(%arg0: i32) -> (i32, i32) {
    %c0_i32 = arith.constant 0 : i32
    %c0_i32_0 = arith.constant 0 : i32
    return %arg0, %c0_i32 : i32, i32
  }
  func.func @transform_1(%arg0: i32) -> (i32, i32) {
    %c0_i32 = arith.constant 0 : i32
    %c0_i32_0 = arith.constant 0 : i32
    %c0_i32_1 = arith.constant 0 : i32
    return %c0_i32, %c0_i32_0 : i32, i32
  }
  func.func @transform_2(%arg0: i32) -> (i32, i32) {
    %c0_i32 = arith.constant 0 : i32
    %c0_i32_0 = arith.constant 0 : i32
    %c0_i32_1 = arith.constant 0 : i32
    return %c0_i32, %c0_i32_0 : i32, i32
  }
  func.func @transform_3(%arg0: i32) -> (i32, i32) {
    %c0_i32 = arith.constant 0 : i32
    %c0_i32_0 = arith.constant 0 : i32
    %c0_i32_1 = arith.constant 0 : i32
    return %c0_i32, %c0_i32_0 : i32, i32
  }
  func.func @transform_4(%arg0: i32) -> (i32, i32) {
    %c0_i32 = arith.constant 0 : i32
    %c0_i32_0 = arith.constant 0 : i32
    %c0_i32_1 = arith.constant 0 : i32
    return %c0_i32, %c0_i32_0 : i32, i32
  }
  func.func @transform_5(%arg0: i32) -> (i32, i32) {
    %c0_i32 = arith.constant 0 : i32
    %c0_i32_0 = arith.constant 0 : i32
    %c0_i32_1 = arith.constant 0 : i32
    return %c0_i32, %c0_i32_0 : i32, i32
  }
  func.func @transform_6(%arg0: i32) -> (i32, i32) {
    %c0_i32 = arith.constant 0 : i32
    %c0_i32_0 = arith.constant 0 : i32
    %c0_i32_1 = arith.constant 0 : i32
    return %c0_i32, %c0_i32_0 : i32, i32
  }
  func.func @transform_7(%arg0: i32) -> (i32, i32) {
    %c0_i32 = arith.constant 0 : i32
    %c0_i32_0 = arith.constant 0 : i32
    return %arg0, %c0_i32 : i32, i32
  }
}

</mosaic_0001>

<llo_original>
// kernel: tpu_custom_call.1
$region0: #{tpu_custom_call.1}
  #allocation0 [shape = 'u32[]', space=smem, size = 0x4, offset = 0x4, fixed_abs, tag = 'smem constant byte address 0x4 - core index']
  #allocation1 [shape = 'u32[144,128]{1,0:T(1,128)}', space=vmem, size = 0x12000, scoped, tag = 'internal scratch']
  #allocation2 [shape = 'f32[1,1]{1,0:T(1,128)S(1)}', space=vmem, size = 0x200, scoped, tag = 'scoped memory for tpu_custom_call.1']
  %s0 = inlined_call_operand.hbm [shape: f32[8,16], index: 0, kind: input, shape index: {}]
  %s1 = inlined_call_operand.hbm [shape: bf16[16,32], index: 1, kind: input, shape index: {}]
  %s2 = inlined_call_operand.vmem [shape: f32[1,32], index: 2, kind: input, shape index: {}]
  %s3 = inlined_call_operand.hbm [shape: bf16[32,32], index: 3, kind: input, shape index: {}]
  %s4 = inlined_call_operand.vmem [shape: f32[1,32], index: 4, kind: input, shape index: {}]
  %s5 = inlined_call_operand.vmem [shape: f32[1,32], index: 5, kind: input, shape index: {}]
  %s6 = inlined_call_operand.<no memory space> [shape: f32[1,1], index: 6, kind: input, shape index: {}]
  %s7 = inlined_call_operand.vmem [shape: f32[8,1], index: 7, kind: output, shape index: {}]
  %s8 = sld [smem:[#allocation0]]
  $region50: #{tpu_custom_call.1} parent=0
    _
  %s10 = ssub.s32 1, %s8
  %s11 = scalar_select 0, %s10, %s8
  %v12 = vstv %s6
  %13 = vst [vmem:[#allocation2] sm:$0x1] %v12
  $region1: #{tpu_custom_call.1} parent=0
    #allocation3 [shape = 'u8[4096]{0}', space=vmem, size = 0x1000, scoped, tag = 'input window, operand 0, single buffered']
    #allocation4 [shape = 's32[1]{0}', space=sflag, size = 0x4, scoped, tag = 'scoped memory for tpu_custom_call.1']
    #allocation5 [shape = 'u8[4096]{0}', space=vmem, size = 0x1000, scoped, tag = 'input window, operand 1, single buffered']
    #allocation6 [shape = 's32[1]{0}', space=sflag, size = 0x4, scoped, tag = 'scoped memory for tpu_custom_call.1']
    #allocation7 [shape = 'u8[8192]{0}', space=vmem, size = 0x2000, scoped, tag = 'input window, operand 3, single buffered']
    %14 = vsyncpa [#allocation4], 0
    %15 = vsyncpa [#allocation6], 0
    // Predicated region
    $region2: #{tpu_custom_call.1} parent=1 // pred_check
      _
    $region3: #{tpu_custom_call.1} parent=1 // pred_check_branch
      %17 = sbr.rel (0) target = $region5
    $region4: #{tpu_custom_call.1} parent=1 // pred_region
      %s19 = ssub.s32 128, 128
      %20 = vsyncadd [#allocation4], %s19
      %s22 = sshll.u32 [#allocation3], 4
      %s23 = int_to_ptr.vmem [resolvable:$true] %s22
      %25 = dma.hbm_to_vmem [thread:$0]  %s0, 128, %s23, [#allocation4]
    $region5: #{tpu_custom_call.1} parent=1 // pred_fallthru
      _
    // Predicated region
    $region6: #{tpu_custom_call.1} parent=1 // pred_check
      _
    $region7: #{tpu_custom_call.1} parent=1 // pred_check_branch
      %27 = sbr.rel (0) target = $region9
    $region8: #{tpu_custom_call.1} parent=1 // pred_region
      %s29 = ssub.s32 128, 128
      %30 = vsyncadd [#allocation6], %s29
      %s31 = sshll.u32 [#allocation5], 4
      %s32 = int_to_ptr.vmem [resolvable:$true] %s31
      %37 = dma.hbm_to_vmem [thread:$0]  %s1, 128, %s32, [#allocation6], 64, 64, 4
    $region9: #{tpu_custom_call.1} parent=1 // pred_fallthru
      _
    // Predicated region
    $region10: #{tpu_custom_call.1} parent=1 // pred_check
      _
    $region11: #{tpu_custom_call.1} parent=1 // pred_check_branch
      %39 = sbr.rel (0) target = $region13
    $region12: #{tpu_custom_call.1} parent=1 // pred_region
      _
    $region13: #{tpu_custom_call.1} parent=1 // pred_fallthru
      _
    // Predicated region
    $region14: #{tpu_custom_call.1} parent=1 // pred_check
      _
    $region15: #{tpu_custom_call.1} parent=1 // pred_check_branch
      %41 = sbr.rel (0) target = $region17
    $region16: #{tpu_custom_call.1} parent=1 // pred_region
      %s43 = ssub.s32 256, 256
      %44 = vsyncadd [#allocation6], %s43
      %s45 = sshll.u32 [#allocation7], 4
      %s46 = int_to_ptr.vmem [resolvable:$true] %s45
      %51 = dma.hbm_to_vmem [thread:$0]  %s3, 256, %s46, [#allocation6], 64, 64, 4
    $region17: #{tpu_custom_call.1} parent=1 // pred_fallthru
      _
    // Predicated region
    $region18: #{tpu_custom_call.1} parent=1 // pred_check
      _
    $region19: #{tpu_custom_call.1} parent=1 // pred_check_branch
      %53 = sbr.rel (0) target = $region21
    $region20: #{tpu_custom_call.1} parent=1 // pred_region
      _
    $region21: #{tpu_custom_call.1} parent=1 // pred_fallthru
      _
    // Predicated region
    $region22: #{tpu_custom_call.1} parent=1 // pred_check
      _
    $region23: #{tpu_custom_call.1} parent=1 // pred_check_branch
      %55 = sbr.rel (0) target = $region25
    $region24: #{tpu_custom_call.1} parent=1 // pred_region
      _
    $region25: #{tpu_custom_call.1} parent=1 // pred_fallthru
      _
    // Predicated region
    $region26: #{tpu_custom_call.1} parent=1 // pred_check
      _
    $region27: #{tpu_custom_call.1} parent=1 // pred_check_branch
      %57 = sbr.rel (0) target = $region29
    $region28: #{tpu_custom_call.1} parent=1 // pred_region
      _
    $region29: #{tpu_custom_call.1} parent=1 // pred_fallthru
      _
    // Predicated region
    $region30: #{tpu_custom_call.1} parent=1 // pred_check
      _
    $region31: #{tpu_custom_call.1} parent=1 // pred_check_branch
      %59 = sbr.rel (0) target = $region33
    $region32: #{tpu_custom_call.1} parent=1 // pred_region
      %60 = dma.done [#allocation4], 128
    $region33: #{tpu_custom_call.1} parent=1 // pred_fallthru
      _
    // Predicated region
    $region34: #{tpu_custom_call.1} parent=1 // pred_check
      _
    $region35: #{tpu_custom_call.1} parent=1 // pred_check_branch
      %62 = sbr.rel (0) target = $region37
    $region36: #{tpu_custom_call.1} parent=1 // pred_region
      %63 = dma.done [#allocation6], 128
    $region37: #{tpu_custom_call.1} parent=1 // pred_fallthru
      _
    // Predicated region
    $region38: #{tpu_custom_call.1} parent=1 // pred_check
      _
    $region39: #{tpu_custom_call.1} parent=1 // pred_check_branch
      %65 = sbr.rel (0) target = $region41
    $region40: #{tpu_custom_call.1} parent=1 // pred_region
      %66 = dma.done [#allocation6], 256
    $region41: #{tpu_custom_call.1} parent=1 // pred_fallthru
      _
    %v68 = vld [vmem:[#allocation3] sm:$0xff]
    %v69 = vpack.c.bf16 %v68, %v68
    %v70 = vld [vmem:[#allocation5] sm:$0xf]
    %v71 = vld [vmem:[#allocation5 + $0x4] sm:$0xf]
    %v72 = vld [vmem:[%s2] sm:$0x1]
    %v74 = vlaneseq
    %v75 = vshrl.u32 %v74, 7
    %v76 = vsub.s32 0, %v75
    %v77 = vrot.slane %v72, %v76
    %v81 = vunpack.c.l.b16 %v70
    %v82 = vunpack.c.l.b16 %v71
    %v83 = vpack.c.b16 %v82, %v81
    %vm85 = vcmask 130048
    %v87 = vsel %vm85, %v69, 0
    %89 = vmatprep.subr.bf16.mxu0 0
    %90 = vmatpush1.bf16.msra.mxu0 0
    %91 = vmatprep.subr.bf16.mxu0 0
    %92 = vmatpush1.bf16.msra.mxu0 0
    %93 = vmatprep.subr.bf16.mxu0 0
    %94 = vmatpush1.bf16.msra.mxu0 0
    %95 = vmatprep.subr.bf16.mxu0 0
    %96 = vmatpush1.bf16.msra.mxu0 0
    %97 = vmatprep.subr.bf16.mxu0 0
    %98 = vmatpush1.bf16.msra.mxu0 0
    %99 = vmatprep.subr.bf16.mxu0 0
    %100 = vmatpush1.bf16.msra.mxu0 0
    %101 = vmatprep.subr.bf16.mxu0 0
    %102 = vmatpush1.bf16.msra.mxu0 0
    %103 = vmatprep.subr.bf16.mxu0 0
    %104 = vmatpush1.bf16.msra.mxu0 %v83
    %105 = vmatprep.subr.bf16.mxu0 0
    %106 = vmatpush2.bf16.msra.mxu0 0
    %107 = vmatprep.subr.bf16.mxu0 0
    %108 = vmatpush2.bf16.msra.mxu0 0
    %109 = vmatprep.subr.bf16.mxu0 0
    %110 = vmatpush2.bf16.msra.mxu0 0
    %111 = vmatprep.subr.bf16.mxu0 0
    %112 = vmatpush2.bf16.msra.mxu0 0
    %113 = vmatprep.subr.bf16.mxu0 0
    %114 = vmatpush2.bf16.msra.mxu0 0
    %115 = vmatprep.subr.bf16.mxu0 0
    %116 = vmatpush2.bf16.msra.mxu0 0
    %117 = vmatprep.subr.bf16.mxu0 0
    %118 = vmatpush2.bf16.msra.mxu0 0
    %119 = vmatprep.subr.bf16.mxu0 0
    %120 = vmatpush2.bf16.msra.mxu0 0
    %121 = vmatprep.mubr.bf16.mxu0 0
    %122 = vmatmul.mubr.bf16.gmra.mxu0 %v87
    %v123 = vpop.f32.mrf.mxu0
    %v124 = vadd.f32 %v77, %v123
    %v125 = vpop.f32.mrf.mxu0
    %v126 = vpop.f32.mrf.mxu0
    %v127 = vpop.f32.mrf.mxu0
    %128 = vdwg.mxu0
    %v129 = vmax.f32 %v124, 0.0
    %v130 = vpack.c.bf16 %v129, %v129
    %v131 = vld [vmem:[#allocation7] sm:$0xf]
    %v132 = vld [vmem:[#allocation7 + $0x4] sm:$0xf]
    %v133 = vld [vmem:[#allocation7 + $0x8] sm:$0xf]
    %v134 = vld [vmem:[#allocation7 + $0xc] sm:$0xf]
    %v135 = vld [vmem:[%s4] sm:$0x1]
    %v137 = vlaneseq
    %v138 = vshrl.u32 %v137, 7
    %v139 = vsub.s32 0, %v138
    %v140 = vrot.slane %v135, %v139
    %v146 = vunpack.c.l.b16 %v131
    %v147 = vunpack.c.l.b16 %v132
    %v148 = vunpack.c.l.b16 %v133
    %v149 = vunpack.c.l.b16 %v134
    %v150 = vpack.c.b16 %v147, %v146
    %v151 = vpack.c.b16 %v149, %v148
    %vm154 = vcmask 261120
    %v156 = vsel %vm154, %v130, 0
    %158 = vmatprep.subr.bf16.mxu0 0
    %159 = vmatpush1.bf16.msra.mxu0 0
    %160 = vmatprep.subr.bf16.mxu0 0
    %161 = vmatpush1.bf16.msra.mxu0 0
    %162 = vmatprep.subr.bf16.mxu0 0
    %163 = vmatpush1.bf16.msra.mxu0 0
    %164 = vmatprep.subr.bf16.mxu0 0
    %165 = vmatpush1.bf16.msra.mxu0 0
    %166 = vmatprep.subr.bf16.mxu0 0
    %167 = vmatpush1.bf16.msra.mxu0 0
    %168 = vmatprep.subr.bf16.mxu0 0
    %169 = vmatpush1.bf16.msra.mxu0 0
    %170 = vmatprep.subr.bf16.mxu0 0
    %171 = vmatpush1.bf16.msra.mxu0 %v151
    %172 = vmatprep.subr.bf16.mxu0 0
    %173 = vmatpush1.bf16.msra.mxu0 %v150
    %174 = vmatprep.subr.bf16.mxu0 0
    %175 = vmatpush2.bf16.msra.mxu0 0
    %176 = vmatprep.subr.bf16.mxu0 0
    %177 = vmatpush2.bf16.msra.mxu0 0
    %178 = vmatprep.subr.bf16.mxu0 0
    %179 = vmatpush2.bf16.msra.mxu0 0
    %180 = vmatprep.subr.bf16.mxu0 0
    %181 = vmatpush2.bf16.msra.mxu0 0
    %182 = vmatprep.subr.bf16.mxu0 0
    %183 = vmatpush2.bf16.msra.mxu0 0
    %184 = vmatprep.subr.bf16.mxu0 0
    %185 = vmatpush2.bf16.msra.mxu0 0
    %186 = vmatprep.subr.bf16.mxu0 0
    %187 = vmatpush2.bf16.msra.mxu0 0
    %188 = vmatprep.subr.bf16.mxu0 0
    %189 = vmatpush2.bf16.msra.mxu0 0
    %190 = vmatprep.mubr.bf16.mxu0 0
    %191 = vmatmul.mubr.bf16.gmra.mxu0 %v156
    %v192 = vpop.f32.mrf.mxu0
    %v193 = vadd.f32 %v140, %v192
    %v194 = vpop.f32.mrf.mxu0
    %v195 = vpop.f32.mrf.mxu0
    %v196 = vpop.f32.mrf.mxu0
    %197 = vdwg.mxu0
    %v198 = vmax.f32 %v193, 0.0
    %v199 = vld [vmem:[%s5] sm:$0x1]
    %v201 = vlaneseq
    %v202 = vshrl.u32 %v201, 7
    %v203 = vsub.s32 0, %v202
    %v204 = vrot.slane %v199, %v203
    %v206 = vmul.f32 %v198, %v204
    %v207 = vsel %vm154, %v206, 0.0
    %208 = vadd.xlane.f32.xlu0 %v207
    %v209 = vpop.xlane.xlu0 %208
    %v210 = vld [vmem:[#allocation2] sm:$0x1]
    %v212 = vlaneseq
    %v213 = vshrl.u32 %v212, 7
    %v214 = vsub.s32 0, %v213
    %v215 = vrot.slane %v210, %v214
    %v217 = vadd.f32 %v209, %v215
    %vm218 = vcmask 7168
    %219 = vst.msk [vmem:[%s7] sm:$0xff] %vm218, %v217
    // Predicated region
    $region42: #{tpu_custom_call.1} parent=1 // pred_check
      _
    $region43: #{tpu_custom_call.1} parent=1 // pred_check_branch
      %221 = sbr.rel (0) target = $region45
    $region44: #{tpu_custom_call.1} parent=1 // pred_region
      _
    $region45: #{tpu_custom_call.1} parent=1 // pred_fallthru
      _
    // Predicated region
    $region46: #{tpu_custom_call.1} parent=1 // pred_check
      _
    $region47: #{tpu_custom_call.1} parent=1 // pred_check_branch
      %223 = sbr.rel (0) target = $region49
    $region48: #{tpu_custom_call.1} parent=1 // pred_region
      _
    $region49: #{tpu_custom_call.1} parent=1 // pred_fallthru
      _
    %224 = vsyncpa [#allocation4], 1
    %225 = vsyncpa [#allocation6], 1

</llo_original>
